<compile_context>
chip_gen: v7x
topology: tpu7x:2x2x1
jax: 0.10.0
libtpu: 0.0.40
codegen_flags: <defaults>
</compile_context>

<pallas_src>
import jax
import jax.numpy as jnp
from jax.experimental import pallas as pl
from jax.experimental.pallas import tpu as pltpu

_LANES = 128
_SUBLANES = 8


def _round_up(x, m):
    return ((x + m - 1) // m) * m


def _reward_kernel(bias_ref, ids_ref, out_ref, acc_ref):
    # bias_ref: (1, 1) float32 in SMEM
    # ids_ref : (TB, TS) int tile in VMEM
    # out_ref : (TB, 1) float32, resident across the seq grid axis
    # acc_ref : (TB, 128) float32 VMEM scratch (per-lane partial sums)
    k = pl.program_id(1)

    @pl.when(k == 0)
    def _():
        acc_ref[...] = jnp.zeros_like(acc_ref)

    x = ids_ref[...].astype(jnp.float32)  # [TB, TS], f32 accumulation (exact PyTorch .float().sum() semantics)
    ts = x.shape[1]
    # VPU-only partial reduction: fold TS columns down to 128 lanes with
    # lane-tile-aligned static slices; no XLU work in the hot loop.
    partial = x[:, 0:_LANES]
    for c in range(1, ts // _LANES):
        partial = partial + x[:, c * _LANES:(c + 1) * _LANES]
    acc_ref[...] += partial

    @pl.when(k == pl.num_programs(1) - 1)
    def _():
        # One cross-lane reduce per batch tile, plus the bias, in finalize.
        out_ref[...] = (
            jnp.sum(acc_ref[...], axis=1, keepdims=True) + bias_ref[0, 0]
        )


def dummy_reward_model(input_ids, bias=0.0):
    """input_ids: [batch, seq] integer array -> [batch] float32 rewards."""
    B, S = input_ids.shape

    # Large streaming tiles, capped so 2 * TB * TS * 4B (double-buffered int32
    # input) stays ~8 MiB — comfortable under scoped VMEM on v5e/v6e/v7x.
    TB = min(512, _round_up(B, _SUBLANES))
    TS = min(2048, _round_up(S, _LANES))

    B_pad = _round_up(B, TB)
    S_pad = _round_up(S, TS)
    if (B_pad, S_pad) != (B, S):
        # Zero padding is exact for a sum; padded rows are sliced off below.
        input_ids = jnp.pad(input_ids, ((0, B_pad - B), (0, S_pad - S)))

    bias_arr = jnp.asarray(bias, dtype=jnp.float32).reshape(1, 1)

    grid = (B_pad // TB, S_pad // TS)

    out = pl.pallas_call(
        _reward_kernel,
        out_shape=jax.ShapeDtypeStruct((B_pad, 1), jnp.float32),
        grid=grid,
        in_specs=[
            pl.BlockSpec(memory_space=pltpu.MemorySpace.SMEM),  # bias scalar
            pl.BlockSpec((TB, TS), lambda i, k: (i, k)),        # input tile
        ],
        out_specs=pl.BlockSpec((TB, 1), lambda i, k: (i, 0)),
        scratch_shapes=[pltpu.VMEM((TB, _LANES), jnp.float32)],
        compiler_params=pltpu.CompilerParams(
            dimension_semantics=("parallel", "arbitrary"),
            vmem_limit_bytes=32 * 1024 * 1024,
        ),
    )(bias_arr, input_ids)

    return out[:B, 0]


if __name__ == "__main__":
    key = jax.random.PRNGKey(0)

    # Case 1: tiny shape matching the test module usage.
    batch, seq = 2, 8
    input_ids = jax.random.randint(
        key, (batch, seq), minval=0, maxval=100, dtype=jnp.int32
    )
    bias = 0.5
    result = dummy_reward_model(input_ids, bias=bias)
    result = jax.block_until_ready(result)
    ref = jnp.sum(input_ids.astype(jnp.float32), axis=1) + bias
    assert result.shape == (batch,)
    assert result.dtype == jnp.float32
    assert jnp.allclose(result, ref), (result, ref)

    # Case 2: ragged shapes (exercise padding + the multi-lane-group fold).
    batch2, seq2 = 5, 300
    key2 = jax.random.PRNGKey(0)
    input_ids2 = jax.random.randint(
        key2, (batch2, seq2), minval=0, maxval=100, dtype=jnp.int32
    )
    result2 = jax.block_until_ready(dummy_reward_model(input_ids2, bias=-1.25))
    ref2 = jnp.sum(input_ids2.astype(jnp.float32), axis=1) + (-1.25)
    assert result2.shape == (batch2,)
    assert jnp.allclose(result2, ref2), (result2, ref2)

    print("KERNEL_OK")
</pallas_src>

<mosaic_0001>
module attributes {stable_mosaic.version = 11 : i64} {
  func.func @_reward_kernel(%arg0: i32, %arg1: i32, %arg2: memref<1x1xf32, #tpu.memory_space<smem>>, %arg3: memref<8x128xi32, #tpu.memory_space<vmem>>, %arg4: memref<8x1xf32, #tpu.memory_space<vmem>>, %arg5: memref<8x128xf32, #tpu.memory_space<vmem>>) attributes {dimension_semantics = [#tpu.dimension_semantics<parallel>, #tpu.dimension_semantics<arbitrary>], iteration_bounds = array<i64: 1, 1>, scalar_prefetch = 0 : i64, scratch_operands = 1 : i64, tpu.core_type = #tpu.core_type<tc>, window_params = [{transform_indices = @transform_0, window_bounds = array<i64: 1, 1>}, {transform_indices = @transform_1, window_bounds = array<i64: 8, 128>}, {transform_indices = @transform_2, window_bounds = array<i64: 8, 1>}]} {
    %c0_i32 = arith.constant 0 : i32
    %0 = arith.cmpi eq, %arg1, %c0_i32 : i32
    %1 = arith.extui %0 : i1 to i32
    %c0_i32_0 = arith.constant 0 : i32
    %2 = arith.cmpi ne, %1, %c0_i32_0 : i32
    scf.if %2 {
      %cst = arith.constant 0.000000e+00 : f32
      %11 = vector.broadcast %cst : f32 to vector<8x128xf32>
      %c0_8 = arith.constant 0 : index
      %c0_9 = arith.constant 0 : index
      %12 = vector.load %arg5[%c0_8, %c0_9] : memref<8x128xf32, #tpu.memory_space<vmem>>, vector<8x128xf32>
      tpu.vector_store %arg5[%c0_8, %c0_9], %11 {strides = array<i32>} : memref<8x128xf32, #tpu.memory_space<vmem>>, vector<8x128xf32>,
    } else {
    }
    %c0 = arith.constant 0 : index
    %c0_1 = arith.constant 0 : index
    %3 = vector.load %arg3[%c0, %c0_1] : memref<8x128xi32, #tpu.memory_space<vmem>>, vector<8x128xi32>
    %4 = arith.sitofp %3 : vector<8x128xi32> to vector<8x128xf32>
    %c0_2 = arith.constant 0 : index
    %c0_3 = arith.constant 0 : index
    %5 = vector.load %arg5[%c0_2, %c0_3] : memref<8x128xf32, #tpu.memory_space<vmem>>, vector<8x128xf32>
    %6 = arith.addf %5, %4 : vector<8x128xf32>
    %c0_4 = arith.constant 0 : index
    %c0_5 = arith.constant 0 : index
    %7 = vector.load %arg5[%c0_4, %c0_5] : memref<8x128xf32, #tpu.memory_space<vmem>>, vector<8x128xf32>
    tpu.vector_store %arg5[%c0_4, %c0_5], %6 {strides = array<i32>} : memref<8x128xf32, #tpu.memory_space<vmem>>, vector<8x128xf32>,
    %c0_i32_6 = arith.constant 0 : i32
    %8 = arith.cmpi eq, %arg1, %c0_i32_6 : i32
    %9 = arith.extui %8 : i1 to i32
    %c0_i32_7 = arith.constant 0 : i32
    %10 = arith.cmpi ne, %9, %c0_i32_7 : i32
    scf.if %10 {
      %c0_8 = arith.constant 0 : index
      %c0_9 = arith.constant 0 : index
      %11 = vector.load %arg5[%c0_8, %c0_9] : memref<8x128xf32, #tpu.memory_space<vmem>>, vector<8x128xf32>
      %cst = arith.constant dense<0.000000e+00> : vector<8xf32>
      %12 = vector.multi_reduction <add>, %11, %cst [1] : vector<8x128xf32> to vector<8xf32>
      %13 = vector.shape_cast %12 : vector<8xf32> to vector<8x1xf32>
      %c0_10 = arith.constant 0 : index
      %c0_11 = arith.constant 0 : index
      %14 = memref.load %arg2[%c0_10, %c0_11] : memref<1x1xf32, #tpu.memory_space<smem>>
      %15 = vector.broadcast %14 : f32 to vector<8x1xf32>
      %16 = arith.addf %13, %15 : vector<8x1xf32>
      %c0_12 = arith.constant 0 : index
      %c0_13 = arith.constant 0 : index
      %17 = vector.load %arg4[%c0_12, %c0_13] : memref<8x1xf32, #tpu.memory_space<vmem>>, vector<8x1xf32>
      tpu.vector_store %arg4[%c0_12, %c0_13], %16 {strides = array<i32>} : memref<8x1xf32, #tpu.memory_space<vmem>>, vector<8x1xf32>,
    } else {
    }
    return
  }
  func.func @transform_0(%arg0: i32, %arg1: i32) -> (i32, i32) {
    %c0_i32 = arith.constant 0 : i32
    %c0_i32_0 = arith.constant 0 : i32
    %c0_i32_1 = arith.constant 0 : i32
    return %c0_i32, %c0_i32_0 : i32, i32
  }
  func.func @transform_1(%arg0: i32, %arg1: i32) -> (i32, i32) {
    %c0_i32 = arith.constant 0 : i32
    return %arg0, %arg1 : i32, i32
  }
  func.func @transform_2(%arg0: i32, %arg1: i32) -> (i32, i32) {
    %c0_i32 = arith.constant 0 : i32
    %c0_i32_0 = arith.constant 0 : i32
    return %arg0, %c0_i32 : i32, i32
  }
}

</mosaic_0001>

<llo_original>
// kernel: tpu_custom_call.1
$region0: #{tpu_custom_call.1}
  #allocation0 [shape = 'u32[]', space=smem, size = 0x4, offset = 0x4, fixed_abs, tag = 'smem constant byte address 0x4 - core index']
  #allocation1 [shape = 'u32[144,128]{1,0:T(1,128)}', space=vmem, size = 0x12000, scoped, tag = 'internal scratch']
  #allocation2 [shape = 'f32[8,128]{1,0:T(8,128)}', space=vmem, size = 0x1000, scoped, tag = 'scratch operand']
  #allocation3 [shape = 'f32[1,1]{1,0:T(1,128)S(6)}', space=smem, size = 0x200, scoped, tag = 'scoped memory for tpu_custom_call.1']
  %s0 = inlined_call_operand.<no memory space> [shape: f32[1,1], index: 0, kind: input, shape index: {}]
  %s1 = inlined_call_operand.hbm [shape: s32[8,128], index: 1, kind: input, shape index: {}]
  %s2 = inlined_call_operand.vmem [shape: f32[8,1], index: 2, kind: output, shape index: {}]
  %s3 = sld [smem:[#allocation0]]
  $region30: #{tpu_custom_call.1} parent=0
    _
  %s5 = ssub.s32 1, %s3
  %s6 = scalar_select 0, %s5, %s3
  %7 = sst [smem:[#allocation3]] %s0
  $region1: #{tpu_custom_call.1} parent=0
    #allocation4 [shape = 'u8[4096]{0}', space=vmem, size = 0x1000, scoped, tag = 'input window, operand 1, single buffered']
    #allocation5 [shape = 's32[1]{0}', space=sflag, size = 0x4, scoped, tag = 'scoped memory for tpu_custom_call.1']
    %8 = vsyncpa [#allocation5], 0
    // Predicated region
    $region2: #{tpu_custom_call.1} parent=1 // pred_check
      _
    $region3: #{tpu_custom_call.1} parent=1 // pred_check_branch
      %10 = sbr.rel (0) target = $region5
    $region4: #{tpu_custom_call.1} parent=1 // pred_region
      _
    $region5: #{tpu_custom_call.1} parent=1 // pred_fallthru
      _
    // Predicated region
    $region6: #{tpu_custom_call.1} parent=1 // pred_check
      _
    $region7: #{tpu_custom_call.1} parent=1 // pred_check_branch
      %12 = sbr.rel (0) target = $region9
    $region8: #{tpu_custom_call.1} parent=1 // pred_region
      %s14 = ssub.s32 128, 128
      %15 = vsyncadd [#allocation5], %s14
      %s17 = sshll.u32 [#allocation4], 4
      %s18 = int_to_ptr.vmem [resolvable:$true] %s17
      %20 = dma.hbm_to_vmem [thread:$0]  %s1, 128, %s18, [#allocation5]
    $region9: #{tpu_custom_call.1} parent=1 // pred_fallthru
      _
    // Predicated region
    $region10: #{tpu_custom_call.1} parent=1 // pred_check
      _
    $region11: #{tpu_custom_call.1} parent=1 // pred_check_branch
      %22 = sbr.rel (0) target = $region13
    $region12: #{tpu_custom_call.1} parent=1 // pred_region
      %23 = dma.done [#allocation5], 128
    $region13: #{tpu_custom_call.1} parent=1 // pred_fallthru
      _
    %p24 = scmp.eq.s32.totalorder 0, 0
    // Predicated region
    $region14: #{tpu_custom_call.1} parent=1 // pred_check
      %p25 = pneg %p24
    $region15: #{tpu_custom_call.1} parent=1 // pred_check_branch
      %27 = sbr.rel (%p25) target = $region17
    $region16: #{tpu_custom_call.1} parent=1 // pred_region
      %28 = vst [vmem:[#allocation2] sm:$0xff] 0.0
    $region17: #{tpu_custom_call.1} parent=1 // pred_fallthru
      _
    %v29 = vld [vmem:[#allocation4] sm:$0xff]
    %v30 = vcvt.s32.f32 %v29
    %v31 = vld [vmem:[#allocation2] sm:$0xff]
    %v32 = vadd.f32 %v31, %v30
    %33 = vst [vmem:[#allocation2] sm:$0xff] %v32
    // Predicated region
    $region18: #{tpu_custom_call.1} parent=1 // pred_check
      %p34 = pneg %p24
    $region19: #{tpu_custom_call.1} parent=1 // pred_check_branch
      %36 = sbr.rel (%p34) target = $region21
    $region20: #{tpu_custom_call.1} parent=1 // pred_region
      %v37 = vld [vmem:[#allocation2] sm:$0xff]
      %38 = vadd.xlane.f32.xlu0 %v37
      %v39 = vpop.xlane.xlu0 %38
      %s40 = sld [smem:[#allocation3]]
      %v41 = vstv %s40
      %v42 = vadd.f32 %v39, %v41
      %vm43 = vcmask 7168
      %44 = vst.msk [vmem:[%s2] sm:$0xff] %vm43, %v42
    $region21: #{tpu_custom_call.1} parent=1 // pred_fallthru
      _
    // Predicated region
    $region22: #{tpu_custom_call.1} parent=1 // pred_check
      _
    $region23: #{tpu_custom_call.1} parent=1 // pred_check_branch
      %46 = sbr.rel (0) target = $region25
    $region24: #{tpu_custom_call.1} parent=1 // pred_region
      _
    $region25: #{tpu_custom_call.1} parent=1 // pred_fallthru
      _
    // Predicated region
    $region26: #{tpu_custom_call.1} parent=1 // pred_check
      _
    $region27: #{tpu_custom_call.1} parent=1 // pred_check_branch
      %48 = sbr.rel (0) target = $region29
    $region28: #{tpu_custom_call.1} parent=1 // pred_region
      _
    $region29: #{tpu_custom_call.1} parent=1 // pred_fallthru
      _
    %49 = vsyncpa [#allocation5], 1

</llo_original>
